<compile_context>
chip_gen: v5e
topology: v5e:2x2
jax: 0.10.0
libtpu: 0.0.40
codegen_flags: <defaults>
</compile_context>

<pallas_src>
import functools

import jax
import jax.numpy as jnp
from jax.experimental import pallas as pl
from jax.experimental.pallas import tpu as pltpu


def _ml_softmax_loss_kernel(x_ref, t_ref, o_ref, *, batch_size, block_rows):
    i = pl.program_id(0)

    x = x_ref[...].astype(jnp.float32)        # (TB, C)
    t = t_ref[...].astype(jnp.float32)        # (TB, C)

    # Rows of the last (partial) tile beyond the true batch read undefined
    # block padding -> zero-mask them up-front so no NaN/Inf is ever formed.
    row = i * block_rows + jax.lax.broadcasted_iota(
        jnp.int32, (x.shape[0], 1), 0)                                  # (TB, 1)
    valid = row < batch_size                                            # (TB, 1)
    x = jnp.where(valid, x, 0.0)
    t = jnp.where(valid, t, 0.0)

    # Numerically stable log-sum-exp along the class axis.
    m = jnp.max(x, axis=1, keepdims=True)                               # (TB, 1)
    lse = jnp.log(jnp.sum(jnp.exp(x - m), axis=1, keepdims=True))       # (TB, 1)
    s_t = jnp.sum(t, axis=1, keepdims=True)                             # (TB, 1)
    s_tx = jnp.sum(t * x, axis=1, keepdims=True)                        # (TB, 1)

    # sum(-t * log_softmax(x)) / sum(t) == (m + lse) - sum(t*x)/sum(t)
    s_t_safe = jnp.where(valid, s_t, 1.0)                               # (TB, 1)
    per_row = (m + lse) - s_tx / s_t_safe                               # (TB, 1)
    per_row = jnp.where(valid, per_row, 0.0)

    # Per-tile partial sum -> own output block (batch axis is "parallel").
    o_ref[...] = jnp.sum(per_row, axis=0, keepdims=True)                # (1, 1)


def _sublane_multiple(dtype):
    itemsize = jnp.dtype(dtype).itemsize
    return 8 * max(1, 4 // itemsize)   # f32 -> 8, bf16 -> 16, int8 -> 32


def multi_label_softmax_loss(inputs, targets, *, block_rows=None):
    """Pallas implementation of MultiLabelSoftmaxLoss.forward.

    Args:
      inputs:  (batch_size, num_classes) logits (f32 or bf16).
      targets: (batch_size, num_classes) multi-hot labels (f32/bf16/int8).
               Precondition (same as the PyTorch module): every row has at
               least one positive label, otherwise the loss is NaN.
      block_rows: optional batch-tile size override.
    Returns:
      scalar f32 loss.
    """
    if inputs.shape != targets.shape:
        raise ValueError(
            "Target size ({}) must be the same as input size ({})".format(
                targets.shape, inputs.shape))
    B, C = inputs.shape

    in_itemsize = jnp.dtype(inputs.dtype).itemsize
    tgt_itemsize = jnp.dtype(targets.dtype).itemsize
    # Packed-sublane row multiple (covers both operands).
    sublane = max(_sublane_multiple(inputs.dtype),
                  _sublane_multiple(targets.dtype))

    if block_rows is None:
        # Budget: 2 inputs x 2 pipeline buffers of the native-dtype block,
        # plus ~4 block-sized f32 temporaries (upcasts, exp(x-m), t*x),
        # must stay under ~40 MiB (headroom inside the 48 MiB scoped limit,
        # which itself fits v7x's 64 MiB physical VMEM).  Also cap the HBM
        # traffic per grid step at ~16 MiB so per-step overhead (~0.35 us)
        # is negligible at every generation's HBM bandwidth.
        bytes_per_row_io = C * (in_itemsize + tgt_itemsize)
        bytes_per_row_tmp = C * 4 * 4
        vmem_per_row = 2 * bytes_per_row_io + bytes_per_row_tmp
        vmem_budget = 40 * 1024 * 1024
        hbm_target = 16 * 1024 * 1024
        block_rows = min(vmem_budget // max(vmem_per_row, 1),
                         hbm_target // max(bytes_per_row_io, 1))
        block_rows = max(block_rows, sublane)

    if block_rows >= B:
        block_rows = B                       # single full-extent block
    else:
        block_rows = max(sublane, (block_rows // sublane) * sublane)

    grid = pl.cdiv(B, block_rows)

    kernel = functools.partial(
        _ml_softmax_loss_kernel, batch_size=B, block_rows=block_rows)

    in_bytes = B * C * (in_itemsize + tgt_itemsize)
    cost = pl.CostEstimate(
        flops=6 * B * C,                 # exp-shift, sums, muls (rough)
        transcendentals=B * C + B,       # exp per element + log per row
        bytes_accessed=in_bytes + 4 * grid,
    )

    partials = pl.pallas_call(
        kernel,
        out_shape=jax.ShapeDtypeStruct((grid, 1), jnp.float32),
        grid_spec=pltpu.PrefetchScalarGridSpec(
            num_scalar_prefetch=0,
            grid=(grid,),
            in_specs=[
                pl.BlockSpec((block_rows, C), lambda i: (i, 0)),
                pl.BlockSpec((block_rows, C), lambda i: (i, 0)),
            ],
            out_specs=pl.BlockSpec((1, 1), lambda i: (i, 0)),
        ),
        compiler_params=pltpu.CompilerParams(
            # Per-tile partial outputs -> no carried state -> batch axis is
            # parallel (megacore-shardable on v7x).
            dimension_semantics=("parallel",),
            vmem_limit_bytes=48 * 1024 * 1024,
        ),
        cost_estimate=cost,
    )(inputs, targets)

    # Tiny (grid,) reduction + mean normalization done in plain XLA.
    return jnp.sum(partials) * jnp.float32(1.0 / B)


def _reference_loss(inputs, targets):
    x = inputs.astype(jnp.float32)
    t = targets.astype(jnp.float32)
    log_probs = jax.nn.log_softmax(x, axis=1)
    scale = 1.0 / jnp.sum(t, axis=1)
    cum = jnp.sum(-t * log_probs, axis=1)
    return jnp.mean(cum * scale)


if __name__ == "__main__":
    key = jax.random.PRNGKey(0)
    k_in, k_tgt = jax.random.split(key)

    batch_size, num_classes = 40, 128

    inputs = jax.random.normal(k_in, (batch_size, num_classes),
                               dtype=jnp.float32)

    # Multi-hot targets; guarantee at least one positive label per row so
    # scale_factor = 1/targets.sum(1) is finite (module precondition).
    rand = jax.random.uniform(k_tgt, (batch_size, num_classes))
    targets = (rand < 0.1).astype(jnp.float32)
    targets = targets.at[:, 0].set(1.0)

    ref = _reference_loss(inputs, targets)

    # 1) Auto tile size (single full-extent block at this small shape).
    loss = jax.block_until_ready(multi_label_softmax_loss(inputs, targets))
    assert jnp.allclose(loss, ref, rtol=1e-5, atol=1e-5), (loss, ref)

    # 2) Forced small tiles: multi-step "parallel" grid with a masked partial
    #    last tile (B=40 is not a multiple of 16).
    loss_tiled = jax.block_until_ready(
        multi_label_softmax_loss(inputs, targets, block_rows=16))
    assert jnp.allclose(loss_tiled, ref, rtol=1e-5, atol=1e-5), (loss_tiled, ref)

    # 3) Narrow producer dtypes (recommended bandwidth-saving path):
    #    bf16 logits + int8 multi-hot targets, upcast only inside the kernel.
    inputs_bf16 = inputs.astype(jnp.bfloat16)
    targets_i8 = targets.astype(jnp.int8)
    ref_bf16 = _reference_loss(inputs_bf16, targets_i8)
    loss_bf16 = jax.block_until_ready(
        multi_label_softmax_loss(inputs_bf16, targets_i8))
    assert jnp.allclose(loss_bf16, ref_bf16, rtol=1e-4, atol=1e-4), (
        loss_bf16, ref_bf16)

    # TODO(synk): the PyTorch module's NaN debug-print + sys.exit path is a
    # host-side debugging aid and is intentionally not replicated in-kernel.
    print("KERNEL_OK")
</pallas_src>

<mosaic_0001>
module attributes {stable_mosaic.version = 11 : i64} {
  func.func @_ml_softmax_loss_kernel(%arg0: i32, %arg1: memref<40x128xf32, #tpu.memory_space<vmem>>, %arg2: memref<40x128xf32, #tpu.memory_space<vmem>>, %arg3: memref<1x1xf32, #tpu.memory_space<vmem>>) attributes {dimension_semantics = [#tpu.dimension_semantics<parallel>], iteration_bounds = array<i64: 1>, scalar_prefetch = 0 : i64, scratch_operands = 0 : i64, tpu.core_type = #tpu.core_type<tc>, window_params = [{transform_indices = @transform_0, window_bounds = array<i64: 40, 128>}, {transform_indices = @transform_1, window_bounds = array<i64: 40, 128>}, {transform_indices = @transform_2, window_bounds = array<i64: 1, 1>}]} {
    %c0 = arith.constant 0 : index
    %c0_0 = arith.constant 0 : index
    %0 = vector.load %arg1[%c0, %c0_0] : memref<40x128xf32, #tpu.memory_space<vmem>>, vector<40x128xf32>
    %c0_1 = arith.constant 0 : index
    %c0_2 = arith.constant 0 : index
    %1 = vector.load %arg2[%c0_1, %c0_2] : memref<40x128xf32, #tpu.memory_space<vmem>>, vector<40x128xf32>
    %c40_i32 = arith.constant 40 : i32
    %2 = arith.muli %arg0, %c40_i32 : i32
    %3 = tpu.iota {dimensions = array<i32: 0>} : vector<40x1xi32>
    %4 = vector.broadcast %2 : i32 to vector<40x1xi32>
    %5 = arith.addi %4, %3 : vector<40x1xi32>
    %c40_i32_3 = arith.constant 40 : i32
    %6 = vector.broadcast %c40_i32_3 : i32 to vector<40x1xi32>
    %7 = arith.cmpi slt, %5, %6 : vector<40x1xi32>
    %cst = arith.constant 0.000000e+00 : f32
    %8 = vector.shape_cast %7 : vector<40x1xi1> to vector<40x1xi1>
    %9 = vector.broadcast %8 : vector<40x1xi1> to vector<40x128xi1>
    %10 = vector.broadcast %cst : f32 to vector<40x128xf32>
    %11 = arith.select %9, %0, %10 : vector<40x128xi1>, vector<40x128xf32>
    %cst_4 = arith.constant 0.000000e+00 : f32
    %12 = vector.shape_cast %7 : vector<40x1xi1> to vector<40x1xi1>
    %13 = vector.broadcast %12 : vector<40x1xi1> to vector<40x128xi1>
    %14 = vector.broadcast %cst_4 : f32 to vector<40x128xf32>
    %15 = arith.select %13, %1, %14 : vector<40x128xi1>, vector<40x128xf32>
    %cst_5 = arith.constant dense<0xFF800000> : vector<40xf32>
    %16 = vector.multi_reduction <maximumf>, %11, %cst_5 [1] : vector<40x128xf32> to vector<40xf32>
    %17 = vector.shape_cast %16 : vector<40xf32> to vector<40x1xf32>
    %18 = vector.broadcast %17 : vector<40x1xf32> to vector<40x128xf32>
    %19 = arith.subf %11, %18 : vector<40x128xf32>
    %20 = math.exp %19 : vector<40x128xf32>
    %cst_6 = arith.constant dense<0.000000e+00> : vector<40xf32>
    %21 = vector.multi_reduction <add>, %20, %cst_6 [1] : vector<40x128xf32> to vector<40xf32>
    %22 = vector.shape_cast %21 : vector<40xf32> to vector<40x1xf32>
    %23 = math.log %22 : vector<40x1xf32>
    %cst_7 = arith.constant dense<0.000000e+00> : vector<40xf32>
    %24 = vector.multi_reduction <add>, %15, %cst_7 [1] : vector<40x128xf32> to vector<40xf32>
    %25 = vector.shape_cast %24 : vector<40xf32> to vector<40x1xf32>
    %26 = arith.mulf %15, %11 : vector<40x128xf32>
    %cst_8 = arith.constant dense<0.000000e+00> : vector<40xf32>
    %27 = vector.multi_reduction <add>, %26, %cst_8 [1] : vector<40x128xf32> to vector<40xf32>
    %28 = vector.shape_cast %27 : vector<40xf32> to vector<40x1xf32>
    %cst_9 = arith.constant 1.000000e+00 : f32
    %29 = vector.broadcast %cst_9 : f32 to vector<40x1xf32>
    %30 = arith.select %7, %25, %29 : vector<40x1xi1>, vector<40x1xf32>
    %31 = arith.addf %17, %23 : vector<40x1xf32>
    %32 = arith.divf %28, %30 : vector<40x1xf32>
    %33 = arith.subf %31, %32 : vector<40x1xf32>
    %cst_10 = arith.constant 0.000000e+00 : f32
    %34 = vector.broadcast %cst_10 : f32 to vector<40x1xf32>
    %35 = arith.select %7, %33, %34 : vector<40x1xi1>, vector<40x1xf32>
    %cst_11 = arith.constant dense<0.000000e+00> : vector<1xf32>
    %36 = vector.multi_reduction <add>, %35, %cst_11 [0] : vector<40x1xf32> to vector<1xf32>
    %37 = vector.shape_cast %36 : vector<1xf32> to vector<1x1xf32>
    %c0_12 = arith.constant 0 : index
    %c0_13 = arith.constant 0 : index
    %38 = vector.load %arg3[%c0_12, %c0_13] : memref<1x1xf32, #tpu.memory_space<vmem>>, vector<1x1xf32>
    tpu.vector_store %arg3[%c0_12, %c0_13], %37 {strides = array<i32>} : memref<1x1xf32, #tpu.memory_space<vmem>>, vector<1x1xf32>,
    return
  }
  func.func @transform_0(%arg0: i32) -> (i32, i32) {
    %c0_i32 = arith.constant 0 : i32
    %c0_i32_0 = arith.constant 0 : i32
    return %arg0, %c0_i32 : i32, i32
  }
  func.func @transform_1(%arg0: i32) -> (i32, i32) {
    %c0_i32 = arith.constant 0 : i32
    %c0_i32_0 = arith.constant 0 : i32
    return %arg0, %c0_i32 : i32, i32
  }
  func.func @transform_2(%arg0: i32) -> (i32, i32) {
    %c0_i32 = arith.constant 0 : i32
    %c0_i32_0 = arith.constant 0 : i32
    return %arg0, %c0_i32 : i32, i32
  }
}

</mosaic_0001>

<llo_original>
// kernel: tpu_custom_call.1
$region0: #{tpu_custom_call.1}
  #allocation0 [shape = 'u32[]', space=smem, size = 0x4, offset = 0x4, fixed_abs, tag = 'smem constant byte address 0x4 - core index']
  #allocation1 [shape = 'u32[72,128]{1,0:T(1,128)}', space=vmem, size = 0x9000, scoped, tag = 'internal scratch']
  %s0 = inlined_call_operand.hbm [shape: f32[40,128], index: 0, kind: input, shape index: {}]
  %s1 = inlined_call_operand.hbm [shape: f32[40,128], index: 1, kind: input, shape index: {}]
  %s2 = inlined_call_operand.hbm [shape: f32[1,1], index: 2, kind: output, shape index: {}]
  %s3 = sld [smem:[#allocation0]]
  $region26: #{tpu_custom_call.1} parent=0
    _
  %s5 = ssub.s32 1, %s3
  %s6 = scalar_select 0, %s5, %s3
  $region1: #{tpu_custom_call.1} parent=0
    #allocation2 [shape = 'u8[20480]{0}', space=vmem, size = 0x5000, scoped, tag = 'input window, operand 0, single buffered']
    #allocation3 [shape = 's32[1]{0}', space=sflag, size = 0x4, scoped, tag = 'scoped memory for tpu_custom_call.1']
    #allocation4 [shape = 's32[1]{0}', space=sflag, size = 0x4, scoped, tag = 'scoped memory for tpu_custom_call.1']
    #allocation5 [shape = 'u8[20480]{0}', space=vmem, size = 0x5000, scoped, tag = 'input window, operand 1, single buffered']
    #allocation6 [shape = 's32[1]{0}', space=sflag, size = 0x4, scoped, tag = 'scoped memory for tpu_custom_call.1']
    #allocation7 [shape = 'u8[512]{0}', space=vmem, size = 0x400, scoped, tag = 'output window, operand 0, single buffered']
    %7 = vsyncpa [#allocation3], 0
    %8 = vsyncpa [#allocation6], 0
    %9 = vsyncpa [#allocation4], 0
    // Predicated region
    $region2: #{tpu_custom_call.1} parent=1 // pred_check
      _
    $region3: #{tpu_custom_call.1} parent=1 // pred_check_branch
      %11 = sbr.rel (0) target = $region5
    $region4: #{tpu_custom_call.1} parent=1 // pred_region
      %13 = vsyncadd [#allocation3], 0
      %s14 = sshll.u32 %s0, 4
      %s15 = int_to_ptr.hbm [resolvable:$true] %s14
      %s16 = sshll.u32 [#allocation2], 4
      %s17 = int_to_ptr.vmem [resolvable:$true] %s16
      %22 = dma.hbm_to_vmem [thread:$0]  %s15, 640, %s17, [#allocation3], 128, 128, 8
    $region5: #{tpu_custom_call.1} parent=1 // pred_fallthru
      _
    // Predicated region
    $region6: #{tpu_custom_call.1} parent=1 // pred_check
      _
    $region7: #{tpu_custom_call.1} parent=1 // pred_check_branch
      %24 = sbr.rel (0) target = $region9
    $region8: #{tpu_custom_call.1} parent=1 // pred_region
      %26 = vsyncadd [#allocation6], 0
      %s27 = sshll.u32 %s1, 4
      %s28 = int_to_ptr.hbm [resolvable:$true] %s27
      %s29 = sshll.u32 [#allocation5], 4
      %s30 = int_to_ptr.vmem [resolvable:$true] %s29
      %35 = dma.hbm_to_vmem [thread:$0]  %s28, 640, %s30, [#allocation6], 128, 128, 8
    $region9: #{tpu_custom_call.1} parent=1 // pred_fallthru
      _
    // Predicated region
    $region10: #{tpu_custom_call.1} parent=1 // pred_check
      _
    $region11: #{tpu_custom_call.1} parent=1 // pred_check_branch
      %37 = sbr.rel (0) target = $region13
    $region12: #{tpu_custom_call.1} parent=1 // pred_region
      %39 = dma.done [#allocation3], 640
    $region13: #{tpu_custom_call.1} parent=1 // pred_fallthru
      _
    // Predicated region
    $region14: #{tpu_custom_call.1} parent=1 // pred_check
      _
    $region15: #{tpu_custom_call.1} parent=1 // pred_check_branch
      %41 = sbr.rel (0) target = $region17
    $region16: #{tpu_custom_call.1} parent=1 // pred_region
      %43 = dma.done [#allocation6], 640
    $region17: #{tpu_custom_call.1} parent=1 // pred_fallthru
      _
    %v44 = vld [vmem:[#allocation2] sm:$0xff]
    %v45 = vld [vmem:[#allocation2 + $0x8] sm:$0xff]
    %v46 = vld [vmem:[#allocation2 + $0x10] sm:$0xff]
    %v47 = vld [vmem:[#allocation2 + $0x18] sm:$0xff]
    %v48 = vld [vmem:[#allocation2 + $0x20] sm:$0xff]
    %v49 = vld [vmem:[#allocation5] sm:$0xff]
    %v50 = vld [vmem:[#allocation5 + $0x8] sm:$0xff]
    %v51 = vld [vmem:[#allocation5 + $0x10] sm:$0xff]
    %v52 = vld [vmem:[#allocation5 + $0x18] sm:$0xff]
    %v53 = vld [vmem:[#allocation5 + $0x20] sm:$0xff]
    %s54 = smul.u32 0, 40
    %v55 = vlaneseq
    %v56 = vshrl.u32 %v55, 7
    %v57 = vadd.s32 %v56, 8
    %v58 = vadd.s32 %v56, 16
    %v59 = vadd.s32 %v56, 24
    %v60 = vadd.s32 %v56, 32
    %v61 = vstv %s54
    %v62 = vadd.s32 %v61, %v56
    %v63 = vadd.s32 %v61, %v57
    %v64 = vadd.s32 %v61, %v58
    %v65 = vadd.s32 %v61, %v59
    %v66 = vadd.s32 %v61, %v60
    %vm67 = vcmp.lt.s32.totalorder %v62, 40
    %vm68 = vcmp.lt.s32.totalorder %v63, 40
    %vm69 = vcmp.lt.s32.totalorder %v64, 40
    %vm70 = vcmp.lt.s32.totalorder %v65, 40
    %vm71 = vcmp.lt.s32.totalorder %v66, 40
    %v72 = vsel %vm67, 1, 0
    %v73 = vsel %vm68, 1, 0
    %v74 = vsel %vm69, 1, 0
    %v75 = vsel %vm70, 1, 0
    %v76 = vsel %vm71, 1, 0
    %vm77 = vcmp.eq.s32.totalorder %v72, 1
    %vm78 = vcmp.eq.s32.totalorder %v73, 1
    %vm79 = vcmp.eq.s32.totalorder %v74, 1
    %vm80 = vcmp.eq.s32.totalorder %v75, 1
    %vm81 = vcmp.eq.s32.totalorder %v76, 1
    %v82 = vsel %vm77, %v44, 0.0
    %v83 = vsel %vm78, %v45, 0.0
    %v84 = vsel %vm79, %v46, 0.0
    %v85 = vsel %vm80, %v47, 0.0
    %v86 = vsel %vm81, %v48, 0.0
    %v87 = vsel %vm77, %v49, 0.0
    %v88 = vsel %vm78, %v50, 0.0
    %v89 = vsel %vm79, %v51, 0.0
    %v90 = vsel %vm80, %v52, 0.0
    %v91 = vsel %vm81, %v53, 0.0
    %92 = vmax.xlane.f32.xlu0 %v82
    %v93 = vpop.xlane.xlu0 %92
    %94 = vmax.xlane.f32.xlu0 %v83
    %v95 = vpop.xlane.xlu0 %94
    %96 = vmax.xlane.f32.xlu0 %v84
    %v97 = vpop.xlane.xlu0 %96
    %98 = vmax.xlane.f32.xlu0 %v85
    %v99 = vpop.xlane.xlu0 %98
    %100 = vmax.xlane.f32.xlu0 %v86
    %v101 = vpop.xlane.xlu0 %100
    %v102 = vsub.f32 %v82, %v93
    %v103 = vsub.f32 %v83, %v95
    %v104 = vsub.f32 %v84, %v97
    %v105 = vsub.f32 %v85, %v99
    %v106 = vsub.f32 %v86, %v101
    %v107 = vmul.f32 %v102, 1.442695
    %v108 = vpow.pop %v107
    %v109 = vmul.f32 %v103, 1.442695
    %v110 = vpow.pop %v109
    %v111 = vmul.f32 %v104, 1.442695
    %v112 = vpow.pop %v111
    %v113 = vmul.f32 %v105, 1.442695
    %v114 = vpow.pop %v113
    %v115 = vmul.f32 %v106, 1.442695
    %v116 = vpow.pop %v115
    %117 = vadd.xlane.f32.xlu0 %v108
    %v118 = vpop.xlane.xlu0 %117
    %119 = vadd.xlane.f32.xlu0 %v110
    %v120 = vpop.xlane.xlu0 %119
    %121 = vadd.xlane.f32.xlu0 %v112
    %v122 = vpop.xlane.xlu0 %121
    %123 = vadd.xlane.f32.xlu0 %v114
    %v124 = vpop.xlane.xlu0 %123
    %125 = vadd.xlane.f32.xlu0 %v116
    %v126 = vpop.xlane.xlu0 %125
    %v127 = vlog2.pop %v118
    %v128 = vmul.f32 %v127, 0.6931472
    %v129 = vlog2.pop %v120
    %v130 = vmul.f32 %v129, 0.6931472
    %v131 = vlog2.pop %v122
    %v132 = vmul.f32 %v131, 0.6931472
    %v133 = vlog2.pop %v124
    %v134 = vmul.f32 %v133, 0.6931472
    %v135 = vlog2.pop %v126
    %v136 = vmul.f32 %v135, 0.6931472
    %137 = vadd.xlane.f32.xlu0 %v87
    %v138 = vpop.xlane.xlu0 %137
    %139 = vadd.xlane.f32.xlu0 %v88
    %v140 = vpop.xlane.xlu0 %139
    %141 = vadd.xlane.f32.xlu0 %v89
    %v142 = vpop.xlane.xlu0 %141
    %143 = vadd.xlane.f32.xlu0 %v90
    %v144 = vpop.xlane.xlu0 %143
    %145 = vadd.xlane.f32.xlu0 %v91
    %v146 = vpop.xlane.xlu0 %145
    %v147 = vmul.f32 %v87, %v82
    %v148 = vmul.f32 %v88, %v83
    %v149 = vmul.f32 %v89, %v84
    %v150 = vmul.f32 %v90, %v85
    %v151 = vmul.f32 %v91, %v86
    %152 = vadd.xlane.f32.xlu0 %v147
    %v153 = vpop.xlane.xlu0 %152
    %154 = vadd.xlane.f32.xlu0 %v148
    %v155 = vpop.xlane.xlu0 %154
    %156 = vadd.xlane.f32.xlu0 %v149
    %v157 = vpop.xlane.xlu0 %156
    %158 = vadd.xlane.f32.xlu0 %v150
    %v159 = vpop.xlane.xlu0 %158
    %160 = vadd.xlane.f32.xlu0 %v151
    %v161 = vpop.xlane.xlu0 %160
    %v162 = vsel %vm67, %v138, 1.0
    %v163 = vsel %vm68, %v140, 1.0
    %v164 = vsel %vm69, %v142, 1.0
    %v165 = vsel %vm70, %v144, 1.0
    %v166 = vsel %vm71, %v146, 1.0
    %v167 = vadd.f32 %v93, %v128
    %v168 = vadd.f32 %v95, %v130
    %v169 = vadd.f32 %v97, %v132
    %v170 = vadd.f32 %v99, %v134
    %v171 = vadd.f32 %v101, %v136
    %v172 = vrcp.pop %v162
    %v173 = vmul.f32 %v162, %v172
    %v174 = vsub.f32 1.0, %v173
    %v175 = vmul.f32 %v172, %v174
    %v176 = vadd.f32 %v172, %v175
    %vm177 = vweird.f32 %v162
    %vm178 = vweird.f32 %v172
    %vm179 = vmor %vm177, %vm178
    %v180 = vsel %vm179, %v172, %v176
    %v181 = vand.u32 2147483647, %v162
    %vm182 = vcmp.eq.f32.partialorder %v181, 8.507059e+37
    %v183 = vand.u32 %v162, 2147483648
    %v184 = vor.u32 1.1754944e-38, %v183
    %v185 = vsel %vm182, %v184, %v180
    %v186 = vmul.f32 %v153, %v185
    %v187 = vrcp.pop %v163
    %v188 = vmul.f32 %v163, %v187
    %v189 = vsub.f32 1.0, %v188
    %v190 = vmul.f32 %v187, %v189
    %v191 = vadd.f32 %v187, %v190
    %vm192 = vweird.f32 %v163
    %vm193 = vweird.f32 %v187
    %vm194 = vmor %vm192, %vm193
    %v195 = vsel %vm194, %v187, %v191
    %v196 = vand.u32 2147483647, %v163
    %vm197 = vcmp.eq.f32.partialorder %v196, 8.507059e+37
    %v198 = vand.u32 %v163, 2147483648
    %v199 = vor.u32 1.1754944e-38, %v198
    %v200 = vsel %vm197, %v199, %v195
    %v201 = vmul.f32 %v155, %v200
    %v202 = vrcp.pop %v164
    %v203 = vmul.f32 %v164, %v202
    %v204 = vsub.f32 1.0, %v203
    %v205 = vmul.f32 %v202, %v204
    %v206 = vadd.f32 %v202, %v205
    %vm207 = vweird.f32 %v164
    %vm208 = vweird.f32 %v202
    %vm209 = vmor %vm207, %vm208
    %v210 = vsel %vm209, %v202, %v206
    %v211 = vand.u32 2147483647, %v164
    %vm212 = vcmp.eq.f32.partialorder %v211, 8.507059e+37
    %v213 = vand.u32 %v164, 2147483648
    %v214 = vor.u32 1.1754944e-38, %v213
    %v215 = vsel %vm212, %v214, %v210
    %v216 = vmul.f32 %v157, %v215
    %v217 = vrcp.pop %v165
    %v218 = vmul.f32 %v165, %v217
    %v219 = vsub.f32 1.0, %v218
    %v220 = vmul.f32 %v217, %v219
    %v221 = vadd.f32 %v217, %v220
    %vm222 = vweird.f32 %v165
    %vm223 = vweird.f32 %v217
    %vm224 = vmor %vm222, %vm223
    %v225 = vsel %vm224, %v217, %v221
    %v226 = vand.u32 2147483647, %v165
    %vm227 = vcmp.eq.f32.partialorder %v226, 8.507059e+37
    %v228 = vand.u32 %v165, 2147483648
    %v229 = vor.u32 1.1754944e-38, %v228
    %v230 = vsel %vm227, %v229, %v225
    %v231 = vmul.f32 %v159, %v230
    %v232 = vrcp.pop %v166
    %v233 = vmul.f32 %v166, %v232
    %v234 = vsub.f32 1.0, %v233
    %v235 = vmul.f32 %v232, %v234
    %v236 = vadd.f32 %v232, %v235
    %vm237 = vweird.f32 %v166
    %vm238 = vweird.f32 %v232
    %vm239 = vmor %vm237, %vm238
    %v240 = vsel %vm239, %v232, %v236
    %v241 = vand.u32 2147483647, %v166
    %vm242 = vcmp.eq.f32.partialorder %v241, 8.507059e+37
    %v243 = vand.u32 %v166, 2147483648
    %v244 = vor.u32 1.1754944e-38, %v243
    %v245 = vsel %vm242, %v244, %v240
    %v246 = vmul.f32 %v161, %v245
    %v247 = vsub.f32 %v167, %v186
    %v248 = vsub.f32 %v168, %v201
    %v249 = vsub.f32 %v169, %v216
    %v250 = vsub.f32 %v170, %v231
    %v251 = vsub.f32 %v171, %v246
    %v252 = vsel %vm67, %v247, 0.0
    %v253 = vsel %vm68, %v248, 0.0
    %v254 = vsel %vm69, %v249, 0.0
    %v255 = vsel %vm70, %v250, 0.0
    %v256 = vsel %vm71, %v251, 0.0
    %v257 = vadd.f32 %v252, %v253
    %v258 = vadd.f32 %v257, %v254
    %v259 = vadd.f32 %v258, %v255
    %v260 = vadd.f32 %v259, %v256
    %v261 = vrot.slane %v260, 4
    %v262 = vadd.f32 %v260, %v261
    %v263 = vrot.slane %v262, 2
    %v264 = vadd.f32 %v262, %v263
    %v265 = vrot.slane %v264, 1
    %v266 = vadd.f32 %v264, %v265
    %vm267 = vcmask 0
    %268 = vst.msk [vmem:[#allocation7] sm:$0x1] %vm267, %v266
    // Predicated region
    $region18: #{tpu_custom_call.1} parent=1 // pred_check
      _
    $region19: #{tpu_custom_call.1} parent=1 // pred_check_branch
      %270 = sbr.rel (0) target = $region21
    $region20: #{tpu_custom_call.1} parent=1 // pred_region
      %272 = vsyncadd [#allocation4], 0
      %s274 = sshll.u32 [#allocation7], 4
      %s275 = int_to_ptr.vmem [resolvable:$true] %s274
      %s276 = sshll.u32 %s2, 4
      %s277 = int_to_ptr.hbm [resolvable:$true] %s276
      %279 = dma.vmem_to_hbm [thread:$0]  %s275, 16, %s277, [#allocation4]
    $region21: #{tpu_custom_call.1} parent=1 // pred_fallthru
      _
    // Predicated region
    $region22: #{tpu_custom_call.1} parent=1 // pred_check
      _
    $region23: #{tpu_custom_call.1} parent=1 // pred_check_branch
      %281 = sbr.rel (0) target = $region25
    $region24: #{tpu_custom_call.1} parent=1 // pred_region
      %283 = dma.done [#allocation4], 16
    $region25: #{tpu_custom_call.1} parent=1 // pred_fallthru
      _
    %284 = vsyncpa [#allocation3], 1
    %285 = vsyncpa [#allocation6], 1
    %286 = vsyncpa [#allocation4], 1

</llo_original>
